<compile_context>
chip_gen: v6e
topology: v6e:2x2x1
jax: 0.10.0
libtpu: 0.0.40
codegen_flags: <defaults>
</compile_context>

<pallas_src>
import numpy as np
import jax
import jax.numpy as jnp
from jax.experimental import pallas as pl
from jax.experimental.pallas import tpu as pltpu

# ----------------- configuration (synthetic, matches module __init__ constraints) ---------
BATCH = 2
T_HIST = 16
D_INPUT = 8
KERNEL_SIZES = [3, 5, 7, 9]        # odd, > 1 (k == 1 would make the torch trim x[:, :, 0:-0] empty)
N_FILTERS = [4, 4, 4, 4]
N_HEADS = len(KERNEL_SIZES)        # merge_heads_conv hardcodes 4 input channels -> 4 heads
N_LAYERS_ENCODER = 2
N_LAYERS_DECODER = 2
D_HIDDEN_DECODER = 32
N_OPS = 2                          # reduce_ops_list = [mean, max]  (in this concat order)

K_MAX = max(KERNEL_SIZES)
PAD_MAX = (K_MAX - 1) // 2         # 4
HL = D_HIDDEN_DECODER * N_LAYERS_DECODER

# padded-time scratch layout: write the signal at a sublane-aligned offset (8) so all stores
# are aligned; conv windows then start at WRITE_OFF - PAD_MAX + dt (unaligned *reads* only).
WRITE_OFF = 8
W_BASE = WRITE_OFF - PAD_MAX       # 4
T_BUF = 32                         # >= WRITE_OFF + T_HIST + PAD_MAX, multiple of 8


def _elu(v):
    return jnp.where(v > 0, v, jnp.exp(jnp.minimum(v, 0.0)) - 1.0)


# ----------------------------------- fused forward kernel ---------------------------------
def fused_forward_kernel(x_ref, wall_ref, wmean_ref, wmax_ref, bhc_ref, sc_ref,
                         hc_ref, xpad_ref):
    # x_ref     : [B, T, D]          input sequence
    # wall_ref  : [K_MAX, D]         folded conv/reduce/merge weight (same for every layer)
    # wmean_ref : [D, 2*HL]          output-linear weights hitting the time-mean features (h | c)
    # wmax_ref  : [D, 2*HL]          output-linear weights hitting the time-max  features (h | c)
    # bhc_ref   : [1, 2*HL]          output-linear biases (h | c)
    # sc_ref    : SMEM [2]           [s_total (residual scale), b_total (folded bias)]
    # hc_ref    : [B, 2*HL]          lane-dense output, split into h/c in the wrapper
    # xpad_ref  : VMEM [B, T_BUF, D] zero-padded scratch holding the current layer input
    s = sc_ref[0]
    b_all = sc_ref[1]
    wall = wall_ref[...]                                    # [K_MAX, D]

    xpad_ref[...] = jnp.zeros_like(xpad_ref)                # zero pads once; interior rewritten
    X = x_ref[...]                                          # [B, T, D]

    for _ in range(N_LAYERS_ENCODER):                       # torch module reuses the same weights
        xpad_ref[:, pl.ds(WRITE_OFF, T_HIST), :] = X        # aligned interior store
        xp = xpad_ref[...]                                  # [B, T_BUF, D]
        acc = jnp.zeros((BATCH, T_HIST, D_INPUT), jnp.float32)
        for dt in range(K_MAX):                             # "same" conv: 9 shifted VPU FMAs
            acc = acc + xp[:, W_BASE + dt:W_BASE + dt + T_HIST, :] * wall[dt:dt + 1, :]
        conv = jnp.sum(acc, axis=2, keepdims=True)          # [B, T, 1] folded filter+head reduce
        X = _elu(s * X + conv + b_all)                      # residual scale + merged bias + ELU

    mean_f = jnp.mean(X, axis=1)                            # [B, D]  reduce op 0 (mean)
    max_f = jnp.max(X, axis=1)                              # [B, D]  reduce op 1 (max)
    hc = (jnp.dot(mean_f, wmean_ref[...], preferred_element_type=jnp.float32)
          + jnp.dot(max_f, wmax_ref[...], preferred_element_type=jnp.float32)
          + bhc_ref[...])                                   # [B, 2*HL] = [2, 128]
    hc_ref[...] = _elu(hc)


def run_forward(x, packed):
    def vspec(shape):
        n = len(shape)
        return pl.BlockSpec(shape, lambda i, _n=n: (0,) * _n)

    return pl.pallas_call(
        fused_forward_kernel,
        out_shape=jax.ShapeDtypeStruct((BATCH, 2 * HL), jnp.float32),
        grid=(1,),
        in_specs=[
            vspec((BATCH, T_HIST, D_INPUT)),
            vspec((K_MAX, D_INPUT)),
            vspec((D_INPUT, 2 * HL)),
            vspec((D_INPUT, 2 * HL)),
            vspec((1, 2 * HL)),
            pl.BlockSpec(memory_space=pltpu.MemorySpace.SMEM),
        ],
        out_specs=vspec((BATCH, 2 * HL)),
        scratch_shapes=[pltpu.VMEM((BATCH, T_BUF, D_INPUT), jnp.float32)],
        compiler_params=pltpu.CompilerParams(dimension_semantics=("arbitrary",)),
    )(x, packed["W_ALL"], packed["W_MEAN"], packed["W_MAX"], packed["B_HC"], packed["SC"])


@jax.jit
def forward(x, packed):
    hc = run_forward(x, packed)                             # [B, 2*HL] lane-dense
    h = hc[:, :HL].reshape(BATCH, D_HIDDEN_DECODER, N_LAYERS_DECODER).transpose(2, 0, 1)
    c = hc[:, HL:].reshape(BATCH, D_HIDDEN_DECODER, N_LAYERS_DECODER).transpose(2, 0, 1)
    return h, c


# ----------------------------- deterministic parameter setup ------------------------------
def init_params(key):
    ks = jax.random.split(key, 4 * N_HEADS + 6)
    i = 0
    p = {"w_conv": [], "b_conv": [], "w_red": [], "b_red": []}
    for hh in range(N_HEADS):
        k, F = KERNEL_SIZES[hh], N_FILTERS[hh]
        s = 1.0 / np.sqrt(k * D_INPUT)
        p["w_conv"].append(jax.random.uniform(ks[i], (F, 1, k, D_INPUT), jnp.float32, -s, s)); i += 1
        p["b_conv"].append(jax.random.uniform(ks[i], (F,), jnp.float32, -s, s)); i += 1
        rs = 1.0 / np.sqrt(F)
        p["w_red"].append(jax.random.uniform(ks[i], (1, F, 1, 1), jnp.float32, -rs, rs)); i += 1
        p["b_red"].append(jax.random.uniform(ks[i], (1,), jnp.float32, -rs, rs)); i += 1
    ms = 0.5
    p["w_merge"] = jax.random.uniform(ks[i], (1, N_HEADS, 1, 1), jnp.float32, -ms, ms); i += 1
    p["b_merge"] = jax.random.uniform(ks[i], (1,), jnp.float32, -ms, ms); i += 1
    ls = 1.0 / np.sqrt(D_INPUT * N_OPS)
    p["w_lin_h"] = jax.random.uniform(ks[i], (HL, D_INPUT * N_OPS), jnp.float32, -ls, ls); i += 1
    p["b_lin_h"] = jax.random.uniform(ks[i], (HL,), jnp.float32, -ls, ls); i += 1
    p["w_lin_c"] = jax.random.uniform(ks[i], (HL, D_INPUT * N_OPS), jnp.float32, -ls, ls); i += 1
    p["b_lin_c"] = jax.random.uniform(ks[i], (HL,), jnp.float32, -ls, ls); i += 1
    return p


def pack_params(p):
    # Algebraic fold of (per-head conv -> 1x1 filter reduce -> repeat-D -> residual -> 1x1 merge):
    #   W_all[dt, d] = sum_h wm[h] * sum_f WC[h, dt, d, f] * wr[h, f]   (kernels center-embedded)
    #   s_total     = sum_h wm[h]
    #   b_total     = sum_h wm[h] * (sum_f bc[h,f]*wr[h,f] + br[h]) + bm
    W_all = np.zeros((K_MAX, D_INPUT), np.float64)
    s_total = 0.0
    b_total = float(np.asarray(p["b_merge"])[0])
    for hh in range(N_HEADS):
        k = KERNEL_SIZES[hh]
        off = (K_MAX - k) // 2                               # center-embed smaller kernels
        w = np.asarray(p["w_conv"][hh], np.float64)[:, 0]    # [F, k, D]
        bc = np.asarray(p["b_conv"][hh], np.float64)         # [F]
        wr = np.asarray(p["w_red"][hh], np.float64)[0, :, 0, 0]   # [F]
        br = float(np.asarray(p["b_red"][hh])[0])
        wm = float(np.asarray(p["w_merge"])[0, hh, 0, 0])
        W_all[off:off + k, :] += wm * np.einsum("fkd,f->kd", w, wr)
        s_total += wm
        b_total += wm * (float(bc @ wr) + br)

    # Head: Linear(concat([mean, max])) split into mean/max halves, h|c packed along lanes.
    WhT = np.asarray(p["w_lin_h"], np.float32).T             # [2D, HL]
    WcT = np.asarray(p["w_lin_c"], np.float32).T             # [2D, HL]
    W_MEAN = np.concatenate([WhT[:D_INPUT], WcT[:D_INPUT]], axis=1)   # [D, 2*HL]
    W_MAX = np.concatenate([WhT[D_INPUT:], WcT[D_INPUT:]], axis=1)    # [D, 2*HL]
    B_HC = np.concatenate([np.asarray(p["b_lin_h"], np.float32),
                           np.asarray(p["b_lin_c"], np.float32)]).reshape(1, 2 * HL)

    return dict(
        W_ALL=jnp.asarray(W_all, dtype=jnp.float32),
        SC=jnp.asarray(np.array([s_total, b_total], np.float32)),
        W_MEAN=jnp.asarray(W_MEAN),
        W_MAX=jnp.asarray(W_MAX),
        B_HC=jnp.asarray(B_HC),
    )


# ---------------------- pure-JAX reference mirroring the PyTorch code ----------------------
def ref_forward(x, p):
    hp = jax.lax.Precision.HIGHEST

    def conv2d(inp, w, b):
        y = jax.lax.conv_general_dilated(inp, w, window_strides=(1, 1), padding="VALID",
                                         dimension_numbers=("NCHW", "OIHW", "NCHW"),
                                         precision=hp)
        return y + b.reshape(1, -1, 1, 1)

    X = x[:, None, :, :]                                # [B, 1, T, D]  (NCHW)
    for _ in range(N_LAYERS_ENCODER):
        outs = []
        for hh in range(N_HEADS):
            k = KERNEL_SIZES[hh]
            pad = k - 1
            xx = jnp.pad(X, ((0, 0), (0, 0), (pad, pad), (0, 0)))
            xx = conv2d(xx, p["w_conv"][hh], p["b_conv"][hh])
            ind = (k - 1) // 2
            xx = xx[:, :, ind:xx.shape[2] - ind, :]
            xx = conv2d(xx, p["w_red"][hh], p["b_red"][hh])
            xx = jnp.tile(xx, (1, 1, 1, D_INPUT))
            xx = xx + X
            outs.append(xx)
        Xc = jnp.concatenate(outs, axis=1)
        X = jax.nn.elu(conv2d(Xc, p["w_merge"], p["b_merge"]))
    v = jnp.concatenate([jnp.mean(X, axis=2), jnp.max(X, axis=2)], axis=2)   # [B, 1, 2D]
    v = jnp.squeeze(v, axis=1)
    h = jax.nn.elu(jnp.dot(v, p["w_lin_h"].T, precision=hp) + p["b_lin_h"])
    c = jax.nn.elu(jnp.dot(v, p["w_lin_c"].T, precision=hp) + p["b_lin_c"])
    h = h.reshape(BATCH, D_HIDDEN_DECODER, N_LAYERS_DECODER).transpose(2, 0, 1)
    c = c.reshape(BATCH, D_HIDDEN_DECODER, N_LAYERS_DECODER).transpose(2, 0, 1)
    return h, c


if __name__ == "__main__":
    key = jax.random.PRNGKey(0)
    kp, kx = jax.random.split(key)
    params = init_params(kp)
    packed = pack_params(params)

    x = jax.random.normal(kx, (BATCH, T_HIST, D_INPUT), jnp.float32)

    h, c = forward(x, packed)
    jax.block_until_ready((h, c))

    h_ref, c_ref = ref_forward(x, params)
    np.testing.assert_allclose(np.asarray(h), np.asarray(h_ref), rtol=1e-2, atol=1e-2)
    np.testing.assert_allclose(np.asarray(c), np.asarray(c_ref), rtol=1e-2, atol=1e-2)
    assert h.shape == (N_LAYERS_DECODER, BATCH, D_HIDDEN_DECODER)
    assert c.shape == (N_LAYERS_DECODER, BATCH, D_HIDDEN_DECODER)

    print("KERNEL_OK")
</pallas_src>

<mosaic_0001>
module attributes {stable_mosaic.version = 11 : i64} {
  func.func @fused_forward_kernel(%arg0: i32, %arg1: memref<2x16x8xf32, #tpu.memory_space<vmem>>, %arg2: memref<9x8xf32, #tpu.memory_space<vmem>>, %arg3: memref<8x128xf32, #tpu.memory_space<vmem>>, %arg4: memref<8x128xf32, #tpu.memory_space<vmem>>, %arg5: memref<1x128xf32, #tpu.memory_space<vmem>>, %arg6: memref<2xf32, #tpu.memory_space<smem>>, %arg7: memref<2x128xf32, #tpu.memory_space<vmem>>, %arg8: memref<2x32x8xf32, #tpu.memory_space<vmem>>) attributes {dimension_semantics = [#tpu.dimension_semantics<arbitrary>], iteration_bounds = array<i64: 1>, scalar_prefetch = 0 : i64, scratch_operands = 1 : i64, tpu.core_type = #tpu.core_type<tc>, window_params = [{pipeline_mode = #tpu.pipeline_mode<synchronous>, transform_indices = @transform_0, window_bounds = array<i64: 2, 16, 8>}, {pipeline_mode = #tpu.pipeline_mode<synchronous>, transform_indices = @transform_1, window_bounds = array<i64: 9, 8>}, {pipeline_mode = #tpu.pipeline_mode<synchronous>, transform_indices = @transform_2, window_bounds = array<i64: 8, 128>}, {pipeline_mode = #tpu.pipeline_mode<synchronous>, transform_indices = @transform_3, window_bounds = array<i64: 8, 128>}, {pipeline_mode = #tpu.pipeline_mode<synchronous>, transform_indices = @transform_4, window_bounds = array<i64: 1, 128>}, {transform_indices = @transform_5, window_bounds = array<i64: 2>}, {pipeline_mode = #tpu.pipeline_mode<synchronous>, transform_indices = @transform_6, window_bounds = array<i64: 2, 128>}]} {
    %c0 = arith.constant 0 : index
    %0 = memref.load %arg6[%c0] : memref<2xf32, #tpu.memory_space<smem>>
    %c1 = arith.constant 1 : index
    %1 = memref.load %arg6[%c1] : memref<2xf32, #tpu.memory_space<smem>>
    %c0_0 = arith.constant 0 : index
    %c0_1 = arith.constant 0 : index
    %2 = vector.load %arg2[%c0_0, %c0_1] : memref<9x8xf32, #tpu.memory_space<vmem>>, vector<9x8xf32>
    %cst = arith.constant 0.000000e+00 : f32
    %3 = vector.broadcast %cst : f32 to vector<2x32x8xf32>
    %c0_2 = arith.constant 0 : index
    %c0_3 = arith.constant 0 : index
    %c0_4 = arith.constant 0 : index
    %4 = vector.load %arg8[%c0_2, %c0_3, %c0_4] : memref<2x32x8xf32, #tpu.memory_space<vmem>>, vector<2x32x8xf32>
    tpu.vector_store %arg8[%c0_2, %c0_3, %c0_4], %3 {strides = array<i32>} : memref<2x32x8xf32, #tpu.memory_space<vmem>>, vector<2x32x8xf32>,
    %c0_5 = arith.constant 0 : index
    %c0_6 = arith.constant 0 : index
    %c0_7 = arith.constant 0 : index
    %5 = vector.load %arg1[%c0_5, %c0_6, %c0_7] : memref<2x16x8xf32, #tpu.memory_space<vmem>>, vector<2x16x8xf32>
    %c0_8 = arith.constant 0 : index
    %c8 = arith.constant 8 : index
    %c0_9 = arith.constant 0 : index
    %6 = vector.load %arg8[%c0_8, %c8, %c0_9] : memref<2x32x8xf32, #tpu.memory_space<vmem>>, vector<2x16x8xf32>
    tpu.vector_store %arg8[%c0_8, %c8, %c0_9], %5 {strides = array<i32>} : memref<2x32x8xf32, #tpu.memory_space<vmem>>, vector<2x16x8xf32>,
    %c0_10 = arith.constant 0 : index
    %c0_11 = arith.constant 0 : index
    %c0_12 = arith.constant 0 : index
    %7 = vector.load %arg8[%c0_10, %c0_11, %c0_12] : memref<2x32x8xf32, #tpu.memory_space<vmem>>, vector<2x32x8xf32>
    %cst_13 = arith.constant 0.000000e+00 : f32
    %8 = vector.broadcast %cst_13 : f32 to vector<2x16x8xf32>
    %9 = vector.extract_strided_slice %7 {offsets = [0, 4, 0], sizes = [2, 16, 8], strides = [1, 1, 1]} : vector<2x32x8xf32> to vector<2x16x8xf32>
    %10 = vector.extract_strided_slice %2 {offsets = [0, 0], sizes = [1, 8], strides = [1, 1]} : vector<9x8xf32> to vector<1x8xf32>
    %11 = vector.shape_cast %10 : vector<1x8xf32> to vector<1x1x8xf32>
    %12 = vector.broadcast %11 : vector<1x1x8xf32> to vector<2x16x8xf32>
    %13 = arith.mulf %9, %12 : vector<2x16x8xf32>
    %14 = arith.addf %8, %13 : vector<2x16x8xf32>
    %15 = vector.extract_strided_slice %7 {offsets = [0, 5, 0], sizes = [2, 16, 8], strides = [1, 1, 1]} : vector<2x32x8xf32> to vector<2x16x8xf32>
    %16 = vector.extract_strided_slice %2 {offsets = [1, 0], sizes = [1, 8], strides = [1, 1]} : vector<9x8xf32> to vector<1x8xf32>
    %17 = vector.shape_cast %16 : vector<1x8xf32> to vector<1x1x8xf32>
    %18 = vector.broadcast %17 : vector<1x1x8xf32> to vector<2x16x8xf32>
    %19 = arith.mulf %15, %18 : vector<2x16x8xf32>
    %20 = arith.addf %14, %19 : vector<2x16x8xf32>
    %21 = vector.extract_strided_slice %7 {offsets = [0, 6, 0], sizes = [2, 16, 8], strides = [1, 1, 1]} : vector<2x32x8xf32> to vector<2x16x8xf32>
    %22 = vector.extract_strided_slice %2 {offsets = [2, 0], sizes = [1, 8], strides = [1, 1]} : vector<9x8xf32> to vector<1x8xf32>
    %23 = vector.shape_cast %22 : vector<1x8xf32> to vector<1x1x8xf32>
    %24 = vector.broadcast %23 : vector<1x1x8xf32> to vector<2x16x8xf32>
    %25 = arith.mulf %21, %24 : vector<2x16x8xf32>
    %26 = arith.addf %20, %25 : vector<2x16x8xf32>
    %27 = vector.extract_strided_slice %7 {offsets = [0, 7, 0], sizes = [2, 16, 8], strides = [1, 1, 1]} : vector<2x32x8xf32> to vector<2x16x8xf32>
    %28 = vector.extract_strided_slice %2 {offsets = [3, 0], sizes = [1, 8], strides = [1, 1]} : vector<9x8xf32> to vector<1x8xf32>
    %29 = vector.shape_cast %28 : vector<1x8xf32> to vector<1x1x8xf32>
    %30 = vector.broadcast %29 : vector<1x1x8xf32> to vector<2x16x8xf32>
    %31 = arith.mulf %27, %30 : vector<2x16x8xf32>
    %32 = arith.addf %26, %31 : vector<2x16x8xf32>
    %33 = vector.extract_strided_slice %7 {offsets = [0, 8, 0], sizes = [2, 16, 8], strides = [1, 1, 1]} : vector<2x32x8xf32> to vector<2x16x8xf32>
    %34 = vector.extract_strided_slice %2 {offsets = [4, 0], sizes = [1, 8], strides = [1, 1]} : vector<9x8xf32> to vector<1x8xf32>
    %35 = vector.shape_cast %34 : vector<1x8xf32> to vector<1x1x8xf32>
    %36 = vector.broadcast %35 : vector<1x1x8xf32> to vector<2x16x8xf32>
    %37 = arith.mulf %33, %36 : vector<2x16x8xf32>
    %38 = arith.addf %32, %37 : vector<2x16x8xf32>
    %39 = vector.extract_strided_slice %7 {offsets = [0, 9, 0], sizes = [2, 16, 8], strides = [1, 1, 1]} : vector<2x32x8xf32> to vector<2x16x8xf32>
    %40 = vector.extract_strided_slice %2 {offsets = [5, 0], sizes = [1, 8], strides = [1, 1]} : vector<9x8xf32> to vector<1x8xf32>
    %41 = vector.shape_cast %40 : vector<1x8xf32> to vector<1x1x8xf32>
    %42 = vector.broadcast %41 : vector<1x1x8xf32> to vector<2x16x8xf32>
    %43 = arith.mulf %39, %42 : vector<2x16x8xf32>
    %44 = arith.addf %38, %43 : vector<2x16x8xf32>
    %45 = vector.extract_strided_slice %7 {offsets = [0, 10, 0], sizes = [2, 16, 8], strides = [1, 1, 1]} : vector<2x32x8xf32> to vector<2x16x8xf32>
    %46 = vector.extract_strided_slice %2 {offsets = [6, 0], sizes = [1, 8], strides = [1, 1]} : vector<9x8xf32> to vector<1x8xf32>
    %47 = vector.shape_cast %46 : vector<1x8xf32> to vector<1x1x8xf32>
    %48 = vector.broadcast %47 : vector<1x1x8xf32> to vector<2x16x8xf32>
    %49 = arith.mulf %45, %48 : vector<2x16x8xf32>
    %50 = arith.addf %44, %49 : vector<2x16x8xf32>
    %51 = vector.extract_strided_slice %7 {offsets = [0, 11, 0], sizes = [2, 16, 8], strides = [1, 1, 1]} : vector<2x32x8xf32> to vector<2x16x8xf32>
    %52 = vector.extract_strided_slice %2 {offsets = [7, 0], sizes = [1, 8], strides = [1, 1]} : vector<9x8xf32> to vector<1x8xf32>
    %53 = vector.shape_cast %52 : vector<1x8xf32> to vector<1x1x8xf32>
    %54 = vector.broadcast %53 : vector<1x1x8xf32> to vector<2x16x8xf32>
    %55 = arith.mulf %51, %54 : vector<2x16x8xf32>
    %56 = arith.addf %50, %55 : vector<2x16x8xf32>
    %57 = vector.extract_strided_slice %7 {offsets = [0, 12, 0], sizes = [2, 16, 8], strides = [1, 1, 1]} : vector<2x32x8xf32> to vector<2x16x8xf32>
    %58 = vector.extract_strided_slice %2 {offsets = [8, 0], sizes = [1, 8], strides = [1, 1]} : vector<9x8xf32> to vector<1x8xf32>
    %59 = vector.shape_cast %58 : vector<1x8xf32> to vector<1x1x8xf32>
    %60 = vector.broadcast %59 : vector<1x1x8xf32> to vector<2x16x8xf32>
    %61 = arith.mulf %57, %60 : vector<2x16x8xf32>
    %62 = arith.addf %56, %61 : vector<2x16x8xf32>
    %cst_14 = arith.constant dense<0.000000e+00> : vector<2x16xf32>
    %63 = vector.multi_reduction <add>, %62, %cst_14 [2] : vector<2x16x8xf32> to vector<2x16xf32>
    %64 = vector.shape_cast %63 : vector<2x16xf32> to vector<2x16x1xf32>
    %65 = vector.broadcast %0 : f32 to vector<2x16x8xf32>
    %66 = arith.mulf %65, %5 : vector<2x16x8xf32>
    %67 = vector.broadcast %64 : vector<2x16x1xf32> to vector<2x16x8xf32>
    %68 = arith.addf %66, %67 : vector<2x16x8xf32>
    %69 = vector.broadcast %1 : f32 to vector<2x16x8xf32>
    %70 = arith.addf %68, %69 : vector<2x16x8xf32>
    %cst_15 = arith.constant 0.000000e+00 : f32
    %71 = vector.broadcast %cst_15 : f32 to vector<2x16x8xf32>
    %72 = arith.cmpf ogt, %70, %71 : vector<2x16x8xf32>
    %cst_16 = arith.constant 0.000000e+00 : f32
    %73 = vector.broadcast %cst_16 : f32 to vector<2x16x8xf32>
    %74 = arith.minimumf %70, %73 : vector<2x16x8xf32>
    %75 = math.exp %74 : vector<2x16x8xf32>
    %cst_17 = arith.constant 1.000000e+00 : f32
    %76 = vector.broadcast %cst_17 : f32 to vector<2x16x8xf32>
    %77 = arith.subf %75, %76 : vector<2x16x8xf32>
    %78 = arith.select %72, %70, %77 : vector<2x16x8xi1>, vector<2x16x8xf32>
    %c0_18 = arith.constant 0 : index
    %c8_19 = arith.constant 8 : index
    %c0_20 = arith.constant 0 : index
    %79 = vector.load %arg8[%c0_18, %c8_19, %c0_20] : memref<2x32x8xf32, #tpu.memory_space<vmem>>, vector<2x16x8xf32>
    tpu.vector_store %arg8[%c0_18, %c8_19, %c0_20], %78 {strides = array<i32>} : memref<2x32x8xf32, #tpu.memory_space<vmem>>, vector<2x16x8xf32>,
    %c0_21 = arith.constant 0 : index
    %c0_22 = arith.constant 0 : index
    %c0_23 = arith.constant 0 : index
    %80 = vector.load %arg8[%c0_21, %c0_22, %c0_23] : memref<2x32x8xf32, #tpu.memory_space<vmem>>, vector<2x32x8xf32>
    %cst_24 = arith.constant 0.000000e+00 : f32
    %81 = vector.broadcast %cst_24 : f32 to vector<2x16x8xf32>
    %82 = vector.extract_strided_slice %80 {offsets = [0, 4, 0], sizes = [2, 16, 8], strides = [1, 1, 1]} : vector<2x32x8xf32> to vector<2x16x8xf32>
    %83 = vector.extract_strided_slice %2 {offsets = [0, 0], sizes = [1, 8], strides = [1, 1]} : vector<9x8xf32> to vector<1x8xf32>
    %84 = vector.shape_cast %83 : vector<1x8xf32> to vector<1x1x8xf32>
    %85 = vector.broadcast %84 : vector<1x1x8xf32> to vector<2x16x8xf32>
    %86 = arith.mulf %82, %85 : vector<2x16x8xf32>
    %87 = arith.addf %81, %86 : vector<2x16x8xf32>
    %88 = vector.extract_strided_slice %80 {offsets = [0, 5, 0], sizes = [2, 16, 8], strides = [1, 1, 1]} : vector<2x32x8xf32> to vector<2x16x8xf32>
    %89 = vector.extract_strided_slice %2 {offsets = [1, 0], sizes = [1, 8], strides = [1, 1]} : vector<9x8xf32> to vector<1x8xf32>
    %90 = vector.shape_cast %89 : vector<1x8xf32> to vector<1x1x8xf32>
    %91 = vector.broadcast %90 : vector<1x1x8xf32> to vector<2x16x8xf32>
    %92 = arith.mulf %88, %91 : vector<2x16x8xf32>
    %93 = arith.addf %87, %92 : vector<2x16x8xf32>
    %94 = vector.extract_strided_slice %80 {offsets = [0, 6, 0], sizes = [2, 16, 8], strides = [1, 1, 1]} : vector<2x32x8xf32> to vector<2x16x8xf32>
    %95 = vector.extract_strided_slice %2 {offsets = [2, 0], sizes = [1, 8], strides = [1, 1]} : vector<9x8xf32> to vector<1x8xf32>
    %96 = vector.shape_cast %95 : vector<1x8xf32> to vector<1x1x8xf32>
    %97 = vector.broadcast %96 : vector<1x1x8xf32> to vector<2x16x8xf32>
    %98 = arith.mulf %94, %97 : vector<2x16x8xf32>
    %99 = arith.addf %93, %98 : vector<2x16x8xf32>
    %100 = vector.extract_strided_slice %80 {offsets = [0, 7, 0], sizes = [2, 16, 8], strides = [1, 1, 1]} : vector<2x32x8xf32> to vector<2x16x8xf32>
    %101 = vector.extract_strided_slice %2 {offsets = [3, 0], sizes = [1, 8], strides = [1, 1]} : vector<9x8xf32> to vector<1x8xf32>
    %102 = vector.shape_cast %101 : vector<1x8xf32> to vector<1x1x8xf32>
    %103 = vector.broadcast %102 : vector<1x1x8xf32> to vector<2x16x8xf32>
    %104 = arith.mulf %100, %103 : vector<2x16x8xf32>
    %105 = arith.addf %99, %104 : vector<2x16x8xf32>
    %106 = vector.extract_strided_slice %80 {offsets = [0, 8, 0], sizes = [2, 16, 8], strides = [1, 1, 1]} : vector<2x32x8xf32> to vector<2x16x8xf32>
    %107 = vector.extract_strided_slice %2 {offsets = [4, 0], sizes = [1, 8], strides = [1, 1]} : vector<9x8xf32> to vector<1x8xf32>
    %108 = vector.shape_cast %107 : vector<1x8xf32> to vector<1x1x8xf32>
    %109 = vector.broadcast %108 : vector<1x1x8xf32> to vector<2x16x8xf32>
    %110 = arith.mulf %106, %109 : vector<2x16x8xf32>
    %111 = arith.addf %105, %110 : vector<2x16x8xf32>
    %112 = vector.extract_strided_slice %80 {offsets = [0, 9, 0], sizes = [2, 16, 8], strides = [1, 1, 1]} : vector<2x32x8xf32> to vector<2x16x8xf32>
    %113 = vector.extract_strided_slice %2 {offsets = [5, 0], sizes = [1, 8], strides = [1, 1]} : vector<9x8xf32> to vector<1x8xf32>
    %114 = vector.shape_cast %113 : vector<1x8xf32> to vector<1x1x8xf32>
    %115 = vector.broadcast %114 : vector<1x1x8xf32> to vector<2x16x8xf32>
    %116 = arith.mulf %112, %115 : vector<2x16x8xf32>
    %117 = arith.addf %111, %116 : vector<2x16x8xf32>
    %118 = vector.extract_strided_slice %80 {offsets = [0, 10, 0], sizes = [2, 16, 8], strides = [1, 1, 1]} : vector<2x32x8xf32> to vector<2x16x8xf32>
    %119 = vector.extract_strided_slice %2 {offsets = [6, 0], sizes = [1, 8], strides = [1, 1]} : vector<9x8xf32> to vector<1x8xf32>
    %120 = vector.shape_cast %119 : vector<1x8xf32> to vector<1x1x8xf32>
    %121 = vector.broadcast %120 : vector<1x1x8xf32> to vector<2x16x8xf32>
    %122 = arith.mulf %118, %121 : vector<2x16x8xf32>
    %123 = arith.addf %117, %122 : vector<2x16x8xf32>
    %124 = vector.extract_strided_slice %80 {offsets = [0, 11, 0], sizes = [2, 16, 8], strides = [1, 1, 1]} : vector<2x32x8xf32> to vector<2x16x8xf32>
    %125 = vector.extract_strided_slice %2 {offsets = [7, 0], sizes = [1, 8], strides = [1, 1]} : vector<9x8xf32> to vector<1x8xf32>
    %126 = vector.shape_cast %125 : vector<1x8xf32> to vector<1x1x8xf32>
    %127 = vector.broadcast %126 : vector<1x1x8xf32> to vector<2x16x8xf32>
    %128 = arith.mulf %124, %127 : vector<2x16x8xf32>
    %129 = arith.addf %123, %128 : vector<2x16x8xf32>
    %130 = vector.extract_strided_slice %80 {offsets = [0, 12, 0], sizes = [2, 16, 8], strides = [1, 1, 1]} : vector<2x32x8xf32> to vector<2x16x8xf32>
    %131 = vector.extract_strided_slice %2 {offsets = [8, 0], sizes = [1, 8], strides = [1, 1]} : vector<9x8xf32> to vector<1x8xf32>
    %132 = vector.shape_cast %131 : vector<1x8xf32> to vector<1x1x8xf32>
    %133 = vector.broadcast %132 : vector<1x1x8xf32> to vector<2x16x8xf32>
    %134 = arith.mulf %130, %133 : vector<2x16x8xf32>
    %135 = arith.addf %129, %134 : vector<2x16x8xf32>
    %cst_25 = arith.constant dense<0.000000e+00> : vector<2x16xf32>
    %136 = vector.multi_reduction <add>, %135, %cst_25 [2] : vector<2x16x8xf32> to vector<2x16xf32>
    %137 = vector.shape_cast %136 : vector<2x16xf32> to vector<2x16x1xf32>
    %138 = vector.broadcast %0 : f32 to vector<2x16x8xf32>
    %139 = arith.mulf %138, %78 : vector<2x16x8xf32>
    %140 = vector.broadcast %137 : vector<2x16x1xf32> to vector<2x16x8xf32>
    %141 = arith.addf %139, %140 : vector<2x16x8xf32>
    %142 = vector.broadcast %1 : f32 to vector<2x16x8xf32>
    %143 = arith.addf %141, %142 : vector<2x16x8xf32>
    %cst_26 = arith.constant 0.000000e+00 : f32
    %144 = vector.broadcast %cst_26 : f32 to vector<2x16x8xf32>
    %145 = arith.cmpf ogt, %143, %144 : vector<2x16x8xf32>
    %cst_27 = arith.constant 0.000000e+00 : f32
    %146 = vector.broadcast %cst_27 : f32 to vector<2x16x8xf32>
    %147 = arith.minimumf %143, %146 : vector<2x16x8xf32>
    %148 = math.exp %147 : vector<2x16x8xf32>
    %cst_28 = arith.constant 1.000000e+00 : f32
    %149 = vector.broadcast %cst_28 : f32 to vector<2x16x8xf32>
    %150 = arith.subf %148, %149 : vector<2x16x8xf32>
    %151 = arith.select %145, %143, %150 : vector<2x16x8xi1>, vector<2x16x8xf32>
    %cst_29 = arith.constant dense<0.000000e+00> : vector<2x8xf32>
    %152 = vector.multi_reduction <add>, %151, %cst_29 [1] : vector<2x16x8xf32> to vector<2x8xf32>
    %cst_30 = arith.constant 1.600000e+01 : f32
    %153 = vector.broadcast %cst_30 : f32 to vector<2x8xf32>
    %154 = arith.divf %152, %153 : vector<2x8xf32>
    %cst_31 = arith.constant dense<0xFF800000> : vector<2x8xf32>
    %155 = vector.multi_reduction <maximumf>, %151, %cst_31 [1] : vector<2x16x8xf32> to vector<2x8xf32>
    %c0_32 = arith.constant 0 : index
    %c0_33 = arith.constant 0 : index
    %156 = vector.load %arg3[%c0_32, %c0_33] : memref<8x128xf32, #tpu.memory_space<vmem>>, vector<8x128xf32>
    %cst_34 = arith.constant dense<0.000000e+00> : vector<2x128xf32>
    %157 = tpu.matmul %154, %156, %cst_34 {dimension_numbers = #tpu.dot_dimension_numbers<[1], [0], [0], [1], [0, 0, 1, 1], [], []>} : vector<2x8xf32>, vector<8x128xf32>, vector<2x128xf32> -> vector<2x128xf32>
    %c0_35 = arith.constant 0 : index
    %c0_36 = arith.constant 0 : index
    %158 = vector.load %arg4[%c0_35, %c0_36] : memref<8x128xf32, #tpu.memory_space<vmem>>, vector<8x128xf32>
    %cst_37 = arith.constant dense<0.000000e+00> : vector<2x128xf32>
    %159 = tpu.matmul %155, %158, %cst_37 {dimension_numbers = #tpu.dot_dimension_numbers<[1], [0], [0], [1], [0, 0, 1, 1], [], []>} : vector<2x8xf32>, vector<8x128xf32>, vector<2x128xf32> -> vector<2x128xf32>
    %160 = arith.addf %157, %159 : vector<2x128xf32>
    %c0_38 = arith.constant 0 : index
    %c0_39 = arith.constant 0 : index
    %161 = vector.load %arg5[%c0_38, %c0_39] : memref<1x128xf32, #tpu.memory_space<vmem>>, vector<1x128xf32>
    %162 = vector.broadcast %161 : vector<1x128xf32> to vector<2x128xf32>
    %163 = arith.addf %160, %162 : vector<2x128xf32>
    %cst_40 = arith.constant 0.000000e+00 : f32
    %164 = vector.broadcast %cst_40 : f32 to vector<2x128xf32>
    %165 = arith.cmpf ogt, %163, %164 : vector<2x128xf32>
    %cst_41 = arith.constant 0.000000e+00 : f32
    %166 = vector.broadcast %cst_41 : f32 to vector<2x128xf32>
    %167 = arith.minimumf %163, %166 : vector<2x128xf32>
    %168 = math.exp %167 : vector<2x128xf32>
    %cst_42 = arith.constant 1.000000e+00 : f32
    %169 = vector.broadcast %cst_42 : f32 to vector<2x128xf32>
    %170 = arith.subf %168, %169 : vector<2x128xf32>
    %171 = arith.select %165, %163, %170 : vector<2x128xi1>, vector<2x128xf32>
    %c0_43 = arith.constant 0 : index
    %c0_44 = arith.constant 0 : index
    %172 = vector.load %arg7[%c0_43, %c0_44] : memref<2x128xf32, #tpu.memory_space<vmem>>, vector<2x128xf32>
    tpu.vector_store %arg7[%c0_43, %c0_44], %171 {strides = array<i32>} : memref<2x128xf32, #tpu.memory_space<vmem>>, vector<2x128xf32>,
    return
  }
  func.func @transform_0(%arg0: i32) -> (i32, i32, i32) {
    %c0_i32 = arith.constant 0 : i32
    %c0_i32_0 = arith.constant 0 : i32
    %c0_i32_1 = arith.constant 0 : i32
    %c0_i32_2 = arith.constant 0 : i32
    return %c0_i32, %c0_i32_0, %c0_i32_1 : i32, i32, i32
  }
  func.func @transform_1(%arg0: i32) -> (i32, i32) {
    %c0_i32 = arith.constant 0 : i32
    %c0_i32_0 = arith.constant 0 : i32
    %c0_i32_1 = arith.constant 0 : i32
    return %c0_i32, %c0_i32_0 : i32, i32
  }
  func.func @transform_2(%arg0: i32) -> (i32, i32) {
    %c0_i32 = arith.constant 0 : i32
    %c0_i32_0 = arith.constant 0 : i32
    %c0_i32_1 = arith.constant 0 : i32
    return %c0_i32, %c0_i32_0 : i32, i32
  }
  func.func @transform_3(%arg0: i32) -> (i32, i32) {
    %c0_i32 = arith.constant 0 : i32
    %c0_i32_0 = arith.constant 0 : i32
    %c0_i32_1 = arith.constant 0 : i32
    return %c0_i32, %c0_i32_0 : i32, i32
  }
  func.func @transform_4(%arg0: i32) -> (i32, i32) {
    %c0_i32 = arith.constant 0 : i32
    %c0_i32_0 = arith.constant 0 : i32
    %c0_i32_1 = arith.constant 0 : i32
    return %c0_i32, %c0_i32_0 : i32, i32
  }
  func.func @transform_5(%arg0: i32) -> i32 {
    %c0_i32 = arith.constant 0 : i32
    %c0_i32_0 = arith.constant 0 : i32
    return %c0_i32 : i32
  }
  func.func @transform_6(%arg0: i32) -> (i32, i32) {
    %c0_i32 = arith.constant 0 : i32
    %c0_i32_0 = arith.constant 0 : i32
    %c0_i32_1 = arith.constant 0 : i32
    return %c0_i32, %c0_i32_0 : i32, i32
  }
}

</mosaic_0001>

<llo_original>
// kernel: forward.1
$region0: #{forward.1}
  #allocation0 [shape = 'u32[]', space=smem, size = 0x4, offset = 0x4, fixed_abs, tag = 'smem constant byte address 0x4 - core index']
  #allocation1 [shape = 'u32[144,128]{1,0:T(1,128)}', space=vmem, size = 0x12000, scoped, tag = 'internal scratch']
  #allocation2 [shape = 'f32[2,32,8]{2,1,0:T(8,128)}', space=vmem, size = 0x8000, scoped, tag = 'scratch operand']
  %s0 = inlined_call_operand.vmem [shape: f32[2,16,8], index: 0, kind: input, shape index: {}]
  %s1 = inlined_call_operand.vmem [shape: f32[9,8], index: 1, kind: input, shape index: {}]
  %s2 = inlined_call_operand.vmem [shape: f32[8,128], index: 2, kind: input, shape index: {}]
  %s3 = inlined_call_operand.vmem [shape: f32[8,128], index: 3, kind: input, shape index: {}]
  %s4 = inlined_call_operand.vmem [shape: f32[1,128], index: 4, kind: input, shape index: {}]
  %s5 = inlined_call_operand.vmem [shape: f32[2], index: 5, kind: input, shape index: {}]
  %s6 = inlined_call_operand.vmem [shape: f32[2,128], index: 6, kind: output, shape index: {}]
  %s7 = sld [smem:[#allocation0]]
  $region38: #{forward.1} parent=0
    _
  %s9 = ssub.s32 1, %s7
  %s10 = scalar_select 0, %s9, %s7
  $region1: #{forward.1} parent=0
    #allocation3 [shape = 'u8[512]{0}', space=smem, size = 0x200, scoped, tag = 'input window, operand 5, single buffered']
    #allocation4 [shape = 's32[1]{0}', space=sflag, size = 0x4, scoped, tag = 'scoped memory for forward.1']
    %11 = vsyncpa [#allocation4], 0
    // Predicated region
    $region2: #{forward.1} parent=1 // pred_check
      _
    $region3: #{forward.1} parent=1 // pred_check_branch
      %13 = sbr.rel (0) target = $region5
    $region4: #{forward.1} parent=1 // pred_region
      _
    $region5: #{forward.1} parent=1 // pred_fallthru
      _
    // Predicated region
    $region6: #{forward.1} parent=1 // pred_check
      _
    $region7: #{forward.1} parent=1 // pred_check_branch
      %15 = sbr.rel (0) target = $region9
    $region8: #{forward.1} parent=1 // pred_region
      _
    $region9: #{forward.1} parent=1 // pred_fallthru
      _
    // Predicated region
    $region10: #{forward.1} parent=1 // pred_check
      _
    $region11: #{forward.1} parent=1 // pred_check_branch
      %17 = sbr.rel (0) target = $region13
    $region12: #{forward.1} parent=1 // pred_region
      _
    $region13: #{forward.1} parent=1 // pred_fallthru
      _
    // Predicated region
    $region14: #{forward.1} parent=1 // pred_check
      _
    $region15: #{forward.1} parent=1 // pred_check_branch
      %19 = sbr.rel (0) target = $region17
    $region16: #{forward.1} parent=1 // pred_region
      _
    $region17: #{forward.1} parent=1 // pred_fallthru
      _
    // Predicated region
    $region18: #{forward.1} parent=1 // pred_check
      _
    $region19: #{forward.1} parent=1 // pred_check_branch
      %21 = sbr.rel (0) target = $region21
    $region20: #{forward.1} parent=1 // pred_region
      _
    $region21: #{forward.1} parent=1 // pred_fallthru
      _
    // Predicated region
    $region22: #{forward.1} parent=1 // pred_check
      _
    $region23: #{forward.1} parent=1 // pred_check_branch
      %23 = sbr.rel (0) target = $region25
    $region24: #{forward.1} parent=1 // pred_region
      %s25 = ssub.s32 16, 16
      %26 = vsyncadd [#allocation4], %s25
      %s28 = sshll.u32 %s5, 4
      %s29 = int_to_ptr.vmem [resolvable:$true] %s28
      %31 = dma.vmem_to_smem %s29, 16, [#allocation3], [#allocation4]
    $region25: #{forward.1} parent=1 // pred_fallthru
      _
    // Predicated region
    $region26: #{forward.1} parent=1 // pred_check
      _
    $region27: #{forward.1} parent=1 // pred_check_branch
      %33 = sbr.rel (0) target = $region29
    $region28: #{forward.1} parent=1 // pred_region
      %34 = dma.done [#allocation4], 16
    $region29: #{forward.1} parent=1 // pred_fallthru
      _
    %35 = sfence
    %s36 = sld [smem:[#allocation3]]
    %s37 = sld [smem:[#allocation3 + $0x1]]
    %v38 = vld [vmem:[%s1] sm:$0xff]
    %v39 = vld [vmem:[%s1 + $0x8] sm:$0x1]
    %vm40 = vcmask 64512
    %41 = vst.msk [vmem:[#allocation2] sm:$0xff] %vm40, 0.0
    %42 = vst.msk [vmem:[#allocation2 + $0x8] sm:$0xff] %vm40, 0.0
    %43 = vst.msk [vmem:[#allocation2 + $0x10] sm:$0xff] %vm40, 0.0
    %44 = vst.msk [vmem:[#allocation2 + $0x18] sm:$0xff] %vm40, 0.0
    %45 = vst.msk [vmem:[#allocation2 + $0x20] sm:$0xff] %vm40, 0.0
    %46 = vst.msk [vmem:[#allocation2 + $0x28] sm:$0xff] %vm40, 0.0
    %47 = vst.msk [vmem:[#allocation2 + $0x30] sm:$0xff] %vm40, 0.0
    %48 = vst.msk [vmem:[#allocation2 + $0x38] sm:$0xff] %vm40, 0.0
    %v49 = vld [vmem:[%s0] sm:$0xff]
    %v50 = vld [vmem:[%s0 + $0x8] sm:$0xff]
    %v51 = vld [vmem:[%s0 + $0x10] sm:$0xff]
    %v52 = vld [vmem:[%s0 + $0x18] sm:$0xff]
    %53 = vst.msk [vmem:[#allocation2 + $0x8] sm:$0xff] %vm40, %v49
    %54 = vst.msk [vmem:[#allocation2 + $0x10] sm:$0xff] %vm40, %v50
    %55 = vst.msk [vmem:[#allocation2 + $0x28] sm:$0xff] %vm40, %v51
    %56 = vst.msk [vmem:[#allocation2 + $0x30] sm:$0xff] %vm40, %v52
    %v57 = vld [vmem:[#allocation2] sm:$0xff]
    %v58 = vld [vmem:[#allocation2 + $0x8] sm:$0xff]
    %v59 = vld [vmem:[#allocation2 + $0x10] sm:$0xff]
    %v60 = vld [vmem:[#allocation2 + $0x18] sm:$0xff]
    %v61 = vld [vmem:[#allocation2 + $0x20] sm:$0xff]
    %v62 = vld [vmem:[#allocation2 + $0x28] sm:$0xff]
    %v63 = vld [vmem:[#allocation2 + $0x30] sm:$0xff]
    %v64 = vld [vmem:[#allocation2 + $0x38] sm:$0xff]
    %v65 = vlaneseq
    %v66 = vshrl.u32 %v65, 7
    %v67 = vsub.s32 0, %v66
    %v68 = vrot.slane %v38, %v67
    %v69 = vmul.f32 %v57, %v68
    %v70 = vmul.f32 %v58, %v68
    %v71 = vmul.f32 %v59, %v68
    %v72 = vmul.f32 %v61, %v68
    %v73 = vmul.f32 %v62, %v68
    %v74 = vmul.f32 %v63, %v68
    %v75 = vadd.f32 %v69, 0.0
    %v76 = vadd.f32 %v70, 0.0
    %v77 = vadd.f32 %v71, 0.0
    %v78 = vadd.f32 %v72, 0.0
    %v79 = vadd.f32 %v73, 0.0
    %v80 = vadd.f32 %v74, 0.0
    %v81 = vlaneseq
    %v82 = vshrl.u32 %v81, 7
    %v83 = vsub.s32 1, %v82
    %v84 = vrot.slane %v38, %v83
    %v85 = vmul.f32 %v57, %v84
    %v86 = vmul.f32 %v58, %v84
    %v87 = vmul.f32 %v59, %v84
    %v88 = vmul.f32 %v61, %v84
    %v89 = vmul.f32 %v62, %v84
    %v90 = vmul.f32 %v63, %v84
    %vm97 = vcmask 1046528
    %v98 = vrot.slane %v85, 1
    %v99 = vrot.slane %v86, 1
    %v100 = vsel %vm97, %v98, %v99
    %v101 = vrot.slane %v87, 1
    %v102 = vsel %vm97, %v99, %v101
    %v103 = vrot.slane %v88, 1
    %v104 = vrot.slane %v89, 1
    %v105 = vsel %vm97, %v103, %v104
    %v106 = vrot.slane %v90, 1
    %v107 = vsel %vm97, %v104, %v106
    %v114 = vadd.f32 %v75, %v100
    %v115 = vadd.f32 %v76, %v102
    %v116 = vadd.f32 %v77, %v101
    %v117 = vadd.f32 %v78, %v105
    %v118 = vadd.f32 %v79, %v107
    %v119 = vadd.f32 %v80, %v106
    %v120 = vlaneseq
    %v121 = vshrl.u32 %v120, 7
    %v122 = vsub.s32 2, %v121
    %v123 = vrot.slane %v38, %v122
    %v124 = vmul.f32 %v57, %v123
    %v125 = vmul.f32 %v58, %v123
    %v126 = vmul.f32 %v59, %v123
    %v127 = vmul.f32 %v61, %v123
    %v128 = vmul.f32 %v62, %v123
    %v129 = vmul.f32 %v63, %v123
    %vm136 = vcmask 1045504
    %v137 = vrot.slane %v124, 2
    %v138 = vrot.slane %v125, 2
    %v139 = vsel %vm136, %v137, %v138
    %v140 = vrot.slane %v126, 2
    %v141 = vsel %vm136, %v138, %v140
    %v142 = vrot.slane %v127, 2
    %v143 = vrot.slane %v128, 2
    %v144 = vsel %vm136, %v142, %v143
    %v145 = vrot.slane %v129, 2
    %v146 = vsel %vm136, %v143, %v145
    %v153 = vadd.f32 %v114, %v139
    %v154 = vadd.f32 %v115, %v141
    %v155 = vadd.f32 %v116, %v140
    %v156 = vadd.f32 %v117, %v144
    %v157 = vadd.f32 %v118, %v146
    %v158 = vadd.f32 %v119, %v145
    %v159 = vlaneseq
    %v160 = vshrl.u32 %v159, 7
    %v161 = vsub.s32 3, %v160
    %v162 = vrot.slane %v38, %v161
    %v163 = vmul.f32 %v57, %v162
    %v164 = vmul.f32 %v58, %v162
    %v165 = vmul.f32 %v59, %v162
    %v166 = vmul.f32 %v61, %v162
    %v167 = vmul.f32 %v62, %v162
    %v168 = vmul.f32 %v63, %v162
    %vm175 = vcmask 1044480
    %v176 = vrot.slane %v163, 3
    %v177 = vrot.slane %v164, 3
    %v178 = vsel %vm175, %v176, %v177
    %v179 = vrot.slane %v165, 3
    %v180 = vsel %vm175, %v177, %v179
    %v181 = vrot.slane %v166, 3
    %v182 = vrot.slane %v167, 3
    %v183 = vsel %vm175, %v181, %v182
    %v184 = vrot.slane %v168, 3
    %v185 = vsel %vm175, %v182, %v184
    %v192 = vadd.f32 %v153, %v178
    %v193 = vadd.f32 %v154, %v180
    %v194 = vadd.f32 %v155, %v179
    %v195 = vadd.f32 %v156, %v183
    %v196 = vadd.f32 %v157, %v185
    %v197 = vadd.f32 %v158, %v184
    %v198 = vlaneseq
    %v199 = vshrl.u32 %v198, 7
    %v200 = vsub.s32 4, %v199
    %v201 = vrot.slane %v38, %v200
    %v202 = vmul.f32 %v58, %v201
    %v203 = vmul.f32 %v59, %v201
    %v204 = vmul.f32 %v62, %v201
    %v205 = vmul.f32 %v63, %v201
    %vm210 = vcmask 1043456
    %v211 = vrot.slane %v202, 4
    %v212 = vrot.slane %v203, 4
    %v213 = vsel %vm210, %v211, %v212
    %v214 = vrot.slane %v204, 4
    %v215 = vrot.slane %v205, 4
    %v216 = vsel %vm210, %v214, %v215
    %v223 = vadd.f32 %v192, %v211
    %v224 = vadd.f32 %v193, %v213
    %v225 = vadd.f32 %v194, %v212
    %v226 = vadd.f32 %v195, %v214
    %v227 = vadd.f32 %v196, %v216
    %v228 = vadd.f32 %v197, %v215
    %v229 = vlaneseq
    %v230 = vshrl.u32 %v229, 7
    %v231 = vsub.s32 5, %v230
    %v232 = vrot.slane %v38, %v231
    %v233 = vmul.f32 %v58, %v232
    %v234 = vmul.f32 %v59, %v232
    %v235 = vmul.f32 %v60, %v232
    %v236 = vmul.f32 %v62, %v232
    %v237 = vmul.f32 %v63, %v232
    %v238 = vmul.f32 %v64, %v232
    %vm245 = vcmask 1042432
    %v246 = vrot.slane %v233, 5
    %v247 = vrot.slane %v234, 5
    %v248 = vsel %vm245, %v246, %v247
    %v249 = vrot.slane %v235, 5
    %v250 = vsel %vm245, %v247, %v249
    %v251 = vrot.slane %v236, 5
    %v252 = vrot.slane %v237, 5
    %v253 = vsel %vm245, %v251, %v252
    %v254 = vrot.slane %v238, 5
    %v255 = vsel %vm245, %v252, %v254
    %v262 = vadd.f32 %v223, %v246
    %v263 = vadd.f32 %v224, %v248
    %v264 = vadd.f32 %v225, %v250
    %v265 = vadd.f32 %v226, %v251
    %v266 = vadd.f32 %v227, %v253
    %v267 = vadd.f32 %v228, %v255
    %v268 = vlaneseq
    %v269 = vshrl.u32 %v268, 7
    %v270 = vsub.s32 6, %v269
    %v271 = vrot.slane %v38, %v270
    %v272 = vmul.f32 %v58, %v271
    %v273 = vmul.f32 %v59, %v271
    %v274 = vmul.f32 %v60, %v271
    %v275 = vmul.f32 %v62, %v271
    %v276 = vmul.f32 %v63, %v271
    %v277 = vmul.f32 %v64, %v271
    %vm284 = vcmask 1041408
    %v285 = vrot.slane %v272, 6
    %v286 = vrot.slane %v273, 6
    %v287 = vsel %vm284, %v285, %v286
    %v288 = vrot.slane %v274, 6
    %v289 = vsel %vm284, %v286, %v288
    %v290 = vrot.slane %v275, 6
    %v291 = vrot.slane %v276, 6
    %v292 = vsel %vm284, %v290, %v291
    %v293 = vrot.slane %v277, 6
    %v294 = vsel %vm284, %v291, %v293
    %v301 = vadd.f32 %v262, %v285
    %v302 = vadd.f32 %v263, %v287
    %v303 = vadd.f32 %v264, %v289
    %v304 = vadd.f32 %v265, %v290
    %v305 = vadd.f32 %v266, %v292
    %v306 = vadd.f32 %v267, %v294
    %v307 = vlaneseq
    %v308 = vshrl.u32 %v307, 7
    %v309 = vsub.s32 7, %v308
    %v310 = vrot.slane %v38, %v309
    %v311 = vmul.f32 %v58, %v310
    %v312 = vmul.f32 %v59, %v310
    %v313 = vmul.f32 %v60, %v310
    %v314 = vmul.f32 %v62, %v310
    %v315 = vmul.f32 %v63, %v310
    %v316 = vmul.f32 %v64, %v310
    %vm323 = vcmask 1040384
    %v324 = vrot.slane %v311, 7
    %v325 = vrot.slane %v312, 7
    %v326 = vsel %vm323, %v324, %v325
    %v327 = vrot.slane %v313, 7
    %v328 = vsel %vm323, %v325, %v327
    %v329 = vrot.slane %v314, 7
    %v330 = vrot.slane %v315, 7
    %v331 = vsel %vm323, %v329, %v330
    %v332 = vrot.slane %v316, 7
    %v333 = vsel %vm323, %v330, %v332
    %v340 = vadd.f32 %v301, %v324
    %v341 = vadd.f32 %v302, %v326
    %v342 = vadd.f32 %v303, %v328
    %v343 = vadd.f32 %v304, %v329
    %v344 = vadd.f32 %v305, %v331
    %v345 = vadd.f32 %v306, %v333
    %v346 = vlaneseq
    %v347 = vshrl.u32 %v346, 7
    %v348 = vsub.s32 0, %v347
    %v349 = vrot.slane %v39, %v348
    %v350 = vmul.f32 %v58, %v349
    %v351 = vmul.f32 %v59, %v349
    %v352 = vmul.f32 %v60, %v349
    %v353 = vmul.f32 %v62, %v349
    %v354 = vmul.f32 %v63, %v349
    %v355 = vmul.f32 %v64, %v349
    %v356 = vadd.f32 %v340, %v350
    %v357 = vadd.f32 %v341, %v351
    %v358 = vadd.f32 %v342, %v352
    %v359 = vadd.f32 %v343, %v353
    %v360 = vadd.f32 %v344, %v354
    %v361 = vadd.f32 %v345, %v355
    %vm362 = vcmask 64516
    %v363 = vsel %vm362, %v356, 0.0
    %364 = vadd.xlane.f32.xlu0 %v363
    %v365 = vpop.xlane.xlu0 %364
    %v366 = vsel %vm40, %v357, 0.0
    %367 = vadd.xlane.f32.xlu0 %v366
    %v368 = vpop.xlane.xlu0 %367
    %vm369 = vcmask 60416
    %v370 = vsel %vm369, %v358, 0.0
    %371 = vadd.xlane.f32.xlu0 %v370
    %v372 = vpop.xlane.xlu0 %371
    %v373 = vsel %vm362, %v359, 0.0
    %374 = vadd.xlane.f32.xlu0 %v373
    %v375 = vpop.xlane.xlu0 %374
    %v376 = vsel %vm40, %v360, 0.0
    %377 = vadd.xlane.f32.xlu0 %v376
    %v378 = vpop.xlane.xlu0 %377
    %v379 = vsel %vm369, %v361, 0.0
    %380 = vadd.xlane.f32.xlu0 %v379
    %v381 = vpop.xlane.xlu0 %380
    %v382 = vstv %s36
    %v383 = vmul.f32 %v382, %v49
    %v384 = vmul.f32 %v382, %v50
    %v385 = vmul.f32 %v382, %v51
    %v386 = vmul.f32 %v382, %v52
    %v393 = vrot.slane %v365, 4
    %v394 = vrot.slane %v368, 4
    %v395 = vsel %vm210, %v393, %v394
    %v396 = vrot.slane %v372, 4
    %v397 = vsel %vm210, %v394, %v396
    %v398 = vrot.slane %v375, 4
    %v399 = vrot.slane %v378, 4
    %v400 = vsel %vm210, %v398, %v399
    %v401 = vrot.slane %v381, 4
    %v402 = vsel %vm210, %v399, %v401
    %v407 = vadd.f32 %v383, %v395
    %v408 = vadd.f32 %v384, %v397
    %v409 = vadd.f32 %v385, %v400
    %v410 = vadd.f32 %v386, %v402
    %v411 = vstv %s37
    %v412 = vadd.f32 %v407, %v411
    %v413 = vadd.f32 %v408, %v411
    %v414 = vadd.f32 %v409, %v411
    %v415 = vadd.f32 %v410, %v411
    %vm416 = vcmp.gt.f32.partialorder %v412, 0.0
    %vm417 = vcmp.gt.f32.partialorder %v413, 0.0
    %vm418 = vcmp.gt.f32.partialorder %v414, 0.0
    %vm419 = vcmp.gt.f32.partialorder %v415, 0.0
    %v420 = vmin.f32 %v412, 0.0
    %v421 = vmin.f32 %v413, 0.0
    %v422 = vmin.f32 %v414, 0.0
    %v423 = vmin.f32 %v415, 0.0
    %v424 = vmul.f32 %v420, 1.442695
    %v425 = vpow.pop %v424
    %v426 = vmul.f32 %v421, 1.442695
    %v427 = vpow.pop %v426
    %v428 = vmul.f32 %v422, 1.442695
    %v429 = vpow.pop %v428
    %v430 = vmul.f32 %v423, 1.442695
    %v431 = vpow.pop %v430
    %v432 = vsub.f32 %v425, 1.0
    %v433 = vsub.f32 %v427, 1.0
    %v434 = vsub.f32 %v429, 1.0
    %v435 = vsub.f32 %v431, 1.0
    %v436 = vsel %vm416, %v412, %v432
    %v437 = vsel %vm417, %v413, %v433
    %v438 = vsel %vm418, %v414, %v434
    %v439 = vsel %vm419, %v415, %v435
    %440 = vst.msk [vmem:[#allocation2 + $0x8] sm:$0xff] %vm40, %v436
    %441 = vst.msk [vmem:[#allocation2 + $0x10] sm:$0xff] %vm40, %v437
    %442 = vst.msk [vmem:[#allocation2 + $0x28] sm:$0xff] %vm40, %v438
    %443 = vst.msk [vmem:[#allocation2 + $0x30] sm:$0xff] %vm40, %v439
    %v444 = vld [vmem:[#allocation2] sm:$0xff]
    %v445 = vld [vmem:[#allocation2 + $0x8] sm:$0xff]
    %v446 = vld [vmem:[#allocation2 + $0x10] sm:$0xff]
    %v447 = vld [vmem:[#allocation2 + $0x18] sm:$0xff]
    %v448 = vld [vmem:[#allocation2 + $0x20] sm:$0xff]
    %v449 = vld [vmem:[#allocation2 + $0x28] sm:$0xff]
    %v450 = vld [vmem:[#allocation2 + $0x30] sm:$0xff]
    %v451 = vld [vmem:[#allocation2 + $0x38] sm:$0xff]
    %v452 = vmul.f32 %v444, %v68
    %v453 = vmul.f32 %v445, %v68
    %v454 = vmul.f32 %v446, %v68
    %v455 = vmul.f32 %v448, %v68
    %v456 = vmul.f32 %v449, %v68
    %v457 = vmul.f32 %v450, %v68
    %v458 = vadd.f32 %v452, 0.0
    %v459 = vadd.f32 %v453, 0.0
    %v460 = vadd.f32 %v454, 0.0
    %v461 = vadd.f32 %v455, 0.0
    %v462 = vadd.f32 %v456, 0.0
    %v463 = vadd.f32 %v457, 0.0
    %v464 = vmul.f32 %v444, %v84
    %v465 = vmul.f32 %v445, %v84
    %v466 = vmul.f32 %v446, %v84
    %v467 = vmul.f32 %v448, %v84
    %v468 = vmul.f32 %v449, %v84
    %v469 = vmul.f32 %v450, %v84
    %v476 = vrot.slane %v464, 1
    %v477 = vrot.slane %v465, 1
    %v478 = vsel %vm97, %v476, %v477
    %v479 = vrot.slane %v466, 1
    %v480 = vsel %vm97, %v477, %v479
    %v481 = vrot.slane %v467, 1
    %v482 = vrot.slane %v468, 1
    %v483 = vsel %vm97, %v481, %v482
    %v484 = vrot.slane %v469, 1
    %v485 = vsel %vm97, %v482, %v484
    %v492 = vadd.f32 %v458, %v478
    %v493 = vadd.f32 %v459, %v480
    %v494 = vadd.f32 %v460, %v479
    %v495 = vadd.f32 %v461, %v483
    %v496 = vadd.f32 %v462, %v485
    %v497 = vadd.f32 %v463, %v484
    %v498 = vmul.f32 %v444, %v123
    %v499 = vmul.f32 %v445, %v123
    %v500 = vmul.f32 %v446, %v123
    %v501 = vmul.f32 %v448, %v123
    %v502 = vmul.f32 %v449, %v123
    %v503 = vmul.f32 %v450, %v123
    %v510 = vrot.slane %v498, 2
    %v511 = vrot.slane %v499, 2
    %v512 = vsel %vm136, %v510, %v511
    %v513 = vrot.slane %v500, 2
    %v514 = vsel %vm136, %v511, %v513
    %v515 = vrot.slane %v501, 2
    %v516 = vrot.slane %v502, 2
    %v517 = vsel %vm136, %v515, %v516
    %v518 = vrot.slane %v503, 2
    %v519 = vsel %vm136, %v516, %v518
    %v526 = vadd.f32 %v492, %v512
    %v527 = vadd.f32 %v493, %v514
    %v528 = vadd.f32 %v494, %v513
    %v529 = vadd.f32 %v495, %v517
    %v530 = vadd.f32 %v496, %v519
    %v531 = vadd.f32 %v497, %v518
    %v532 = vmul.f32 %v444, %v162
    %v533 = vmul.f32 %v445, %v162
    %v534 = vmul.f32 %v446, %v162
    %v535 = vmul.f32 %v448, %v162
    %v536 = vmul.f32 %v449, %v162
    %v537 = vmul.f32 %v450, %v162
    %v544 = vrot.slane %v532, 3
    %v545 = vrot.slane %v533, 3
    %v546 = vsel %vm175, %v544, %v545
    %v547 = vrot.slane %v534, 3
    %v548 = vsel %vm175, %v545, %v547
    %v549 = vrot.slane %v535, 3
    %v550 = vrot.slane %v536, 3
    %v551 = vsel %vm175, %v549, %v550
    %v552 = vrot.slane %v537, 3
    %v553 = vsel %vm175, %v550, %v552
    %v560 = vadd.f32 %v526, %v546
    %v561 = vadd.f32 %v527, %v548
    %v562 = vadd.f32 %v528, %v547
    %v563 = vadd.f32 %v529, %v551
    %v564 = vadd.f32 %v530, %v553
    %v565 = vadd.f32 %v531, %v552
    %v566 = vmul.f32 %v445, %v201
    %v567 = vmul.f32 %v446, %v201
    %v568 = vmul.f32 %v449, %v201
    %v569 = vmul.f32 %v450, %v201
    %v574 = vrot.slane %v566, 4
    %v575 = vrot.slane %v567, 4
    %v576 = vsel %vm210, %v574, %v575
    %v577 = vrot.slane %v568, 4
    %v578 = vrot.slane %v569, 4
    %v579 = vsel %vm210, %v577, %v578
    %v586 = vadd.f32 %v560, %v574
    %v587 = vadd.f32 %v561, %v576
    %v588 = vadd.f32 %v562, %v575
    %v589 = vadd.f32 %v563, %v577
    %v590 = vadd.f32 %v564, %v579
    %v591 = vadd.f32 %v565, %v578
    %v592 = vmul.f32 %v445, %v232
    %v593 = vmul.f32 %v446, %v232
    %v594 = vmul.f32 %v447, %v232
    %v595 = vmul.f32 %v449, %v232
    %v596 = vmul.f32 %v450, %v232
    %v597 = vmul.f32 %v451, %v232
    %v604 = vrot.slane %v592, 5
    %v605 = vrot.slane %v593, 5
    %v606 = vsel %vm245, %v604, %v605
    %v607 = vrot.slane %v594, 5
    %v608 = vsel %vm245, %v605, %v607
    %v609 = vrot.slane %v595, 5
    %v610 = vrot.slane %v596, 5
    %v611 = vsel %vm245, %v609, %v610
    %v612 = vrot.slane %v597, 5
    %v613 = vsel %vm245, %v610, %v612
    %v620 = vadd.f32 %v586, %v604
    %v621 = vadd.f32 %v587, %v606
    %v622 = vadd.f32 %v588, %v608
    %v623 = vadd.f32 %v589, %v609
    %v624 = vadd.f32 %v590, %v611
    %v625 = vadd.f32 %v591, %v613
    %v626 = vmul.f32 %v445, %v271
    %v627 = vmul.f32 %v446, %v271
    %v628 = vmul.f32 %v447, %v271
    %v629 = vmul.f32 %v449, %v271
    %v630 = vmul.f32 %v450, %v271
    %v631 = vmul.f32 %v451, %v271
    %v638 = vrot.slane %v626, 6
    %v639 = vrot.slane %v627, 6
    %v640 = vsel %vm284, %v638, %v639
    %v641 = vrot.slane %v628, 6
    %v642 = vsel %vm284, %v639, %v641
    %v643 = vrot.slane %v629, 6
    %v644 = vrot.slane %v630, 6
    %v645 = vsel %vm284, %v643, %v644
    %v646 = vrot.slane %v631, 6
    %v647 = vsel %vm284, %v644, %v646
    %v654 = vadd.f32 %v620, %v638
    %v655 = vadd.f32 %v621, %v640
    %v656 = vadd.f32 %v622, %v642
    %v657 = vadd.f32 %v623, %v643
    %v658 = vadd.f32 %v624, %v645
    %v659 = vadd.f32 %v625, %v647
    %v660 = vmul.f32 %v445, %v310
    %v661 = vmul.f32 %v446, %v310
    %v662 = vmul.f32 %v447, %v310
    %v663 = vmul.f32 %v449, %v310
    %v664 = vmul.f32 %v450, %v310
    %v665 = vmul.f32 %v451, %v310
    %v672 = vrot.slane %v660, 7
    %v673 = vrot.slane %v661, 7
    %v674 = vsel %vm323, %v672, %v673
    %v675 = vrot.slane %v662, 7
    %v676 = vsel %vm323, %v673, %v675
    %v677 = vrot.slane %v663, 7
    %v678 = vrot.slane %v664, 7
    %v679 = vsel %vm323, %v677, %v678
    %v680 = vrot.slane %v665, 7
    %v681 = vsel %vm323, %v678, %v680
    %v688 = vadd.f32 %v654, %v672
    %v689 = vadd.f32 %v655, %v674
    %v690 = vadd.f32 %v656, %v676
    %v691 = vadd.f32 %v657, %v677
    %v692 = vadd.f32 %v658, %v679
    %v693 = vadd.f32 %v659, %v681
    %v694 = vmul.f32 %v445, %v349
    %v695 = vmul.f32 %v446, %v349
    %v696 = vmul.f32 %v447, %v349
    %v697 = vmul.f32 %v449, %v349
    %v698 = vmul.f32 %v450, %v349
    %v699 = vmul.f32 %v451, %v349
    %v700 = vadd.f32 %v688, %v694
    %v701 = vadd.f32 %v689, %v695
    %v702 = vadd.f32 %v690, %v696
    %v703 = vadd.f32 %v691, %v697
    %v704 = vadd.f32 %v692, %v698
    %v705 = vadd.f32 %v693, %v699
    %v706 = vsel %vm362, %v700, 0.0
    %707 = vadd.xlane.f32.xlu0 %v706
    %v708 = vpop.xlane.xlu0 %707
    %v709 = vsel %vm40, %v701, 0.0
    %710 = vadd.xlane.f32.xlu0 %v709
    %v711 = vpop.xlane.xlu0 %710
    %v712 = vsel %vm369, %v702, 0.0
    %713 = vadd.xlane.f32.xlu0 %v712
    %v714 = vpop.xlane.xlu0 %713
    %v715 = vsel %vm362, %v703, 0.0
    %716 = vadd.xlane.f32.xlu0 %v715
    %v717 = vpop.xlane.xlu0 %716
    %v718 = vsel %vm40, %v704, 0.0
    %719 = vadd.xlane.f32.xlu0 %v718
    %v720 = vpop.xlane.xlu0 %719
    %v721 = vsel %vm369, %v705, 0.0
    %722 = vadd.xlane.f32.xlu0 %v721
    %v723 = vpop.xlane.xlu0 %722
    %v724 = vmul.f32 %v382, %v436
    %v725 = vmul.f32 %v382, %v437
    %v726 = vmul.f32 %v382, %v438
    %v727 = vmul.f32 %v382, %v439
    %v734 = vrot.slane %v708, 4
    %v735 = vrot.slane %v711, 4
    %v736 = vsel %vm210, %v734, %v735
    %v737 = vrot.slane %v714, 4
    %v738 = vsel %vm210, %v735, %v737
    %v739 = vrot.slane %v717, 4
    %v740 = vrot.slane %v720, 4
    %v741 = vsel %vm210, %v739, %v740
    %v742 = vrot.slane %v723, 4
    %v743 = vsel %vm210, %v740, %v742
    %v748 = vadd.f32 %v724, %v736
    %v749 = vadd.f32 %v725, %v738
    %v750 = vadd.f32 %v726, %v741
    %v751 = vadd.f32 %v727, %v743
    %v752 = vadd.f32 %v748, %v411
    %v753 = vadd.f32 %v749, %v411
    %v754 = vadd.f32 %v750, %v411
    %v755 = vadd.f32 %v751, %v411
    %vm756 = vcmp.gt.f32.partialorder %v752, 0.0
    %vm757 = vcmp.gt.f32.partialorder %v753, 0.0
    %vm758 = vcmp.gt.f32.partialorder %v754, 0.0
    %vm759 = vcmp.gt.f32.partialorder %v755, 0.0
    %v760 = vmin.f32 %v752, 0.0
    %v761 = vmin.f32 %v753, 0.0
    %v762 = vmin.f32 %v754, 0.0
    %v763 = vmin.f32 %v755, 0.0
    %v764 = vmul.f32 %v760, 1.442695
    %v765 = vpow.pop %v764
    %v766 = vmul.f32 %v761, 1.442695
    %v767 = vpow.pop %v766
    %v768 = vmul.f32 %v762, 1.442695
    %v769 = vpow.pop %v768
    %v770 = vmul.f32 %v763, 1.442695
    %v771 = vpow.pop %v770
    %v772 = vsub.f32 %v765, 1.0
    %v773 = vsub.f32 %v767, 1.0
    %v774 = vsub.f32 %v769, 1.0
    %v775 = vsub.f32 %v771, 1.0
    %v776 = vsel %vm756, %v752, %v772
    %v777 = vsel %vm757, %v753, %v773
    %v778 = vsel %vm758, %v754, %v774
    %v779 = vsel %vm759, %v755, %v775
    %v780 = vsel %vm40, %v776, 0.0
    %v781 = vsel %vm40, %v777, 0.0
    %v782 = vadd.f32 %v780, %v781
    %v783 = vrot.slane %v782, 4
    %v784 = vadd.f32 %v782, %v783
    %v785 = vrot.slane %v784, 2
    %v786 = vadd.f32 %v784, %v785
    %v787 = vrot.slane %v786, 1
    %v788 = vadd.f32 %v786, %v787
    %v789 = vsel %vm40, %v778, 0.0
    %v790 = vsel %vm40, %v779, 0.0
    %v791 = vadd.f32 %v789, %v790
    %v792 = vrot.slane %v791, 4
    %v793 = vadd.f32 %v791, %v792
    %v794 = vrot.slane %v793, 2
    %v795 = vadd.f32 %v793, %v794
    %v796 = vrot.slane %v795, 1
    %v797 = vadd.f32 %v795, %v796
    %v798 = vrcp.pop 16.0
    %v799 = vmul.f32 %v788, %v798
    %v800 = vmul.f32 %v797, %v798
    %v801 = vsel %vm40, %v776, -inf
    %v802 = vsel %vm40, %v777, -inf
    %v803 = vmax.f32 %v801, %v802
    %v804 = vrot.slane %v803, 4
    %v805 = vmax.f32 %v803, %v804
    %v806 = vrot.slane %v805, 2
    %v807 = vmax.f32 %v805, %v806
    %v808 = vrot.slane %v807, 1
    %v809 = vmax.f32 %v807, %v808
    %v810 = vsel %vm40, %v778, -inf
    %v811 = vsel %vm40, %v779, -inf
    %v812 = vmax.f32 %v810, %v811
    %v813 = vrot.slane %v812, 4
    %v814 = vmax.f32 %v812, %v813
    %v815 = vrot.slane %v814, 2
    %v816 = vmax.f32 %v814, %v815
    %v817 = vrot.slane %v816, 1
    %v818 = vmax.f32 %v816, %v817
    %v819 = vld [vmem:[%s2] sm:$0xff]
    %v820 = vld [vmem:[%s3] sm:$0xff]
    %vm823 = vcmask 1041409
    %v824 = vsel %vm823, %v818, %v809
    %v825 = vsel %vm40, %v824, 0
    %827 = vmatprep.subr.mxu0 0.0
    %828 = vmatpush1.msra.mxu0 0.0
    %829 = vmatprep.subr.mxu0 0.0
    %830 = vmatpush1.msra.mxu0 0.0
    %831 = vmatprep.subr.mxu0 0.0
    %832 = vmatpush1.msra.mxu0 0.0
    %833 = vmatprep.subr.mxu0 0.0
    %834 = vmatpush1.msra.mxu0 0.0
    %835 = vmatprep.subr.mxu0 0.0
    %836 = vmatpush1.msra.mxu0 0.0
    %837 = vmatprep.subr.mxu0 0.0
    %838 = vmatpush1.msra.mxu0 0.0
    %839 = vmatprep.subr.mxu0 0.0
    %840 = vmatpush1.msra.mxu0 0.0
    %841 = vmatprep.subr.mxu0 0.0
    %842 = vmatpush1.msra.mxu0 0.0
    %843 = vmatprep.subr.mxu0 0.0
    %844 = vmatpush1.msra.mxu0 0.0
    %845 = vmatprep.subr.mxu0 0.0
    %846 = vmatpush1.msra.mxu0 0.0
    %847 = vmatprep.subr.mxu0 0.0
    %848 = vmatpush1.msra.mxu0 0.0
    %849 = vmatprep.subr.mxu0 0.0
    %850 = vmatpush1.msra.mxu0 0.0
    %851 = vmatprep.subr.mxu0 0.0
    %852 = vmatpush1.msra.mxu0 0.0
    %853 = vmatprep.subr.mxu0 0.0
    %854 = vmatpush1.msra.mxu0 0.0
    %855 = vmatprep.subr.mxu0 0.0
    %856 = vmatpush1.msra.mxu0 0.0
    %857 = vmatprep.subr.mxu0 0.0
    %858 = vmatpush1.msra.mxu0 %v820
    %859 = vmatprep.subr.mxu0 0.0
    %860 = vmatpush2.msra.mxu0 0.0
    %861 = vmatprep.subr.mxu0 0.0
    %862 = vmatpush2.msra.mxu0 0.0
    %863 = vmatprep.subr.mxu0 0.0
    %864 = vmatpush2.msra.mxu0 0.0
    %865 = vmatprep.subr.mxu0 0.0
    %866 = vmatpush2.msra.mxu0 0.0
    %867 = vmatprep.subr.mxu0 0.0
    %868 = vmatpush2.msra.mxu0 0.0
    %869 = vmatprep.subr.mxu0 0.0
    %870 = vmatpush2.msra.mxu0 0.0
    %871 = vmatprep.subr.mxu0 0.0
    %872 = vmatpush2.msra.mxu0 0.0
    %873 = vmatprep.subr.mxu0 0.0
    %874 = vmatpush2.msra.mxu0 0.0
    %875 = vmatprep.subr.mxu0 0.0
    %876 = vmatpush2.msra.mxu0 0.0
    %877 = vmatprep.subr.mxu0 0.0
    %878 = vmatpush2.msra.mxu0 0.0
    %879 = vmatprep.subr.mxu0 0.0
    %880 = vmatpush2.msra.mxu0 0.0
    %881 = vmatprep.subr.mxu0 0.0
    %882 = vmatpush2.msra.mxu0 0.0
    %883 = vmatprep.subr.mxu0 0.0
    %884 = vmatpush2.msra.mxu0 0.0
    %885 = vmatprep.subr.mxu0 0.0
    %886 = vmatpush2.msra.mxu0 0.0
    %887 = vmatprep.subr.mxu0 0.0
    %888 = vmatpush2.msra.mxu0 0.0
    %889 = vmatprep.subr.mxu0 0.0
    %890 = vmatpush2.msra.mxu0 0.0
    %891 = vmatprep.mubr.f32.mxu0 0.0
    %892 = vmatmul.mubr.f32.gmra.mxu0 %v825
    %v893 = vpop.f32.mrf.mxu0
    %v894 = vadd.f32 0.0, %v893
    %v895 = vpop.f32.mrf.mxu0
    %896 = vdwg.mxu0
    %v899 = vsel %vm823, %v800, %v799
    %v900 = vsel %vm40, %v899, 0
    %902 = vmatprep.subr.mxu0 0.0
    %903 = vmatpush1.msra.mxu0 0.0
    %904 = vmatprep.subr.mxu0 0.0
    %905 = vmatpush1.msra.mxu0 0.0
    %906 = vmatprep.subr.mxu0 0.0
    %907 = vmatpush1.msra.mxu0 0.0
    %908 = vmatprep.subr.mxu0 0.0
    %909 = vmatpush1.msra.mxu0 0.0
    %910 = vmatprep.subr.mxu0 0.0
    %911 = vmatpush1.msra.mxu0 0.0
    %912 = vmatprep.subr.mxu0 0.0
    %913 = vmatpush1.msra.mxu0 0.0
    %914 = vmatprep.subr.mxu0 0.0
    %915 = vmatpush1.msra.mxu0 0.0
    %916 = vmatprep.subr.mxu0 0.0
    %917 = vmatpush1.msra.mxu0 0.0
    %918 = vmatprep.subr.mxu0 0.0
    %919 = vmatpush1.msra.mxu0 0.0
    %920 = vmatprep.subr.mxu0 0.0
    %921 = vmatpush1.msra.mxu0 0.0
    %922 = vmatprep.subr.mxu0 0.0
    %923 = vmatpush1.msra.mxu0 0.0
    %924 = vmatprep.subr.mxu0 0.0
    %925 = vmatpush1.msra.mxu0 0.0
    %926 = vmatprep.subr.mxu0 0.0
    %927 = vmatpush1.msra.mxu0 0.0
    %928 = vmatprep.subr.mxu0 0.0
    %929 = vmatpush1.msra.mxu0 0.0
    %930 = vmatprep.subr.mxu0 0.0
    %931 = vmatpush1.msra.mxu0 0.0
    %932 = vmatprep.subr.mxu0 0.0
    %933 = vmatpush1.msra.mxu0 %v819
    %934 = vmatprep.subr.mxu0 0.0
    %935 = vmatpush2.msra.mxu0 0.0
    %936 = vmatprep.subr.mxu0 0.0
    %937 = vmatpush2.msra.mxu0 0.0
    %938 = vmatprep.subr.mxu0 0.0
    %939 = vmatpush2.msra.mxu0 0.0
    %940 = vmatprep.subr.mxu0 0.0
    %941 = vmatpush2.msra.mxu0 0.0
    %942 = vmatprep.subr.mxu0 0.0
    %943 = vmatpush2.msra.mxu0 0.0
    %944 = vmatprep.subr.mxu0 0.0
    %945 = vmatpush2.msra.mxu0 0.0
    %946 = vmatprep.subr.mxu0 0.0
    %947 = vmatpush2.msra.mxu0 0.0
    %948 = vmatprep.subr.mxu0 0.0
    %949 = vmatpush2.msra.mxu0 0.0
    %950 = vmatprep.subr.mxu0 0.0
    %951 = vmatpush2.msra.mxu0 0.0
    %952 = vmatprep.subr.mxu0 0.0
    %953 = vmatpush2.msra.mxu0 0.0
    %954 = vmatprep.subr.mxu0 0.0
    %955 = vmatpush2.msra.mxu0 0.0
    %956 = vmatprep.subr.mxu0 0.0
    %957 = vmatpush2.msra.mxu0 0.0
    %958 = vmatprep.subr.mxu0 0.0
    %959 = vmatpush2.msra.mxu0 0.0
    %960 = vmatprep.subr.mxu0 0.0
    %961 = vmatpush2.msra.mxu0 0.0
    %962 = vmatprep.subr.mxu0 0.0
    %963 = vmatpush2.msra.mxu0 0.0
    %964 = vmatprep.subr.mxu0 0.0
    %965 = vmatpush2.msra.mxu0 0.0
    %966 = vmatprep.mubr.f32.mxu0 0.0
    %967 = vmatmul.mubr.f32.gmra.mxu0 %v900
    %v968 = vpop.f32.mrf.mxu0
    %v969 = vadd.f32 %v894, %v968
    %v970 = vpop.f32.mrf.mxu0
    %971 = vdwg.mxu0
    %v972 = vld [vmem:[%s4] sm:$0x1]
    %v974 = vlaneseq
    %v975 = vshrl.u32 %v974, 7
    %v976 = vsub.s32 0, %v975
    %v977 = vrot.slane %v972, %v976
    %v979 = vadd.f32 %v969, %v977
    %vm980 = vcmp.gt.f32.partialorder %v979, 0.0
    %v981 = vmin.f32 %v979, 0.0
    %v982 = vmul.f32 %v981, 1.442695
    %v983 = vpow.pop %v982
    %v984 = vsub.f32 %v983, 1.0
    %v985 = vsel %vm980, %v979, %v984
    %986 = vst [vmem:[%s6] sm:$0x3] %v985
    // Predicated region
    $region30: #{forward.1} parent=1 // pred_check
      _
    $region31: #{forward.1} parent=1 // pred_check_branch
      %988 = sbr.rel (0) target = $region33
    $region32: #{forward.1} parent=1 // pred_region
      _
    $region33: #{forward.1} parent=1 // pred_fallthru
      _
    // Predicated region
    $region34: #{forward.1} parent=1 // pred_check
      _
    $region35: #{forward.1} parent=1 // pred_check_branch
      %990 = sbr.rel (0) target = $region37
    $region36: #{forward.1} parent=1 // pred_region
      _
    $region37: #{forward.1} parent=1 // pred_fallthru
      _
    %991 = vsyncpa [#allocation4], 1

</llo_original>
